<compile_context>
chip_gen: v7x
topology: tpu7x:2x2x1
jax: 0.10.0
libtpu: 0.0.40
codegen_flags: <defaults>
</compile_context>

<pallas_src>
import jax
import jax.numpy as jnp
from jax.experimental import pallas as pl
from jax.experimental.pallas import tpu as pltpu


# ----------------------------------------------------------------------------
# Encoder: features.permute(0, 2, 3, 1).reshape(B, H*W, C)
# ----------------------------------------------------------------------------
# TODO(synk): the frozen pretrained resnet50 backbone in Encoder.__init__ has no
# clean self-contained Pallas equivalent (pretrained weights require file or
# network I/O); the kernel below starts from its (B, C, H, W) feature map.


def _encoder_flatten_kernel(feat_ref, out_ref):
    # feat_ref: (C, H*W) for one batch element; out_ref: (H*W, C).
    # permute(0,2,3,1) + reshape(B,-1,C) fuse into a per-batch 2-D transpose.
    out_ref[...] = feat_ref[...].T


def encoder_forward(features_nchw):
    """(B, C, H, W) resnet feature map -> (B, H*W, C), as in Encoder.forward."""
    B, C, H, W = features_nchw.shape
    P = H * W
    feat = features_nchw.reshape(B, C, P)          # wrapper-side reshape: free
    return pl.pallas_call(
        _encoder_flatten_kernel,
        out_shape=jax.ShapeDtypeStruct((B, P, C), features_nchw.dtype),
        grid=(B,),
        in_specs=[pl.BlockSpec((None, C, P), lambda b: (b, 0, 0))],
        out_specs=pl.BlockSpec((None, P, C), lambda b: (b, 0, 0)),
    )(feat)


# ----------------------------------------------------------------------------
# BahdanauAttention (same file), improved per the performance review.
#
# Faithfulness note: the reference module applies softmax over the *singleton*
# last dim of `energy` (shape (B, P, 1)), so attention_weights are identically
# 1.0, and the PyTorch broadcast  encoder_output (B,P,E) * weights (B,P,1,1)
# only type-checks when B == P, producing
#   context[i, p, e] = sum_j weights[i, j, 0] * encoder_output[j, p, e].
# We reproduce exactly those semantics (and assert B == P).
# ----------------------------------------------------------------------------


def _bahdanau_kernel(enc_ctx_ref, enc_rows_ref, hid_ref, wd_t_ref, bd_ref,
                     we_t_ref, be_ref, wf_ref, bf_ref, ctx_ref, attn_ref):
    B, _ = enc_ctx_ref.shape
    BP, _ = enc_rows_ref.shape
    P = BP // B
    A = wd_t_ref.shape[1]

    # decoder projection: (B, D) @ (D, A) + (1, A) -> (B, A)
    dec_proj = jnp.dot(hid_ref[...], wd_t_ref[...],
                       preferred_element_type=jnp.float32) + bd_ref[...]

    # encoder projection on the wrapper-flattened rows:
    # (B*P, E) @ (E, A) + (1, A) -> (B*P, A) -> (B, P, A)
    enc_proj = (jnp.dot(enc_rows_ref[...], we_t_ref[...],
                        preferred_element_type=jnp.float32) + be_ref[...]
                ).reshape(B, P, A)

    # energy[b, p] = full_attention(tanh(dec_proj[b] + enc_proj[b, p]))
    act = jnp.tanh(dec_proj[:, None, :] + enc_proj)                  # (B, P, A)
    energy = jnp.sum(act * wf_ref[...], axis=-1) + bf_ref[0, 0]      # (B, P)

    # softmax over the module's *singleton* last dim of energy (B, P, 1):
    # max == energy, exp(0) == 1, denominator == numerator, so attn == 1.0
    # exactly (bit-compatible with torch).  Kept as live numeric ops for
    # fidelity to the module's compute graph; review item 3 would collapse
    # this whole path to `attn = 1` and `ctx = broadcast(enc.sum(axis=0))`.
    ex = jnp.exp(energy - energy)
    attn = ex / ex                                                   # (B, P)
    attn_ref[...] = attn                                             # lane-dense slab

    # context[i, p, e] = sum_j attn[i, j] * enc[j, p, e]   (requires P == B);
    # a single lane-dense matmul on the flattened view: (B, P) @ (P, P*E).
    ctx_ref[...] = jnp.dot(attn, enc_ctx_ref[...],
                           preferred_element_type=jnp.float32)


def bahdanau_attention(encoder_output, hidden_decoder, params):
    """Returns (context_vector (B, P, E), attention_weights (B, P, 1))."""
    Wd, bd, We, be, Wf, bf = params
    B, P, E = encoder_output.shape
    A = Wd.shape[0]
    # PyTorch's broadcast in the reference forward only works when B == P.
    assert B == P, "reference semantics require batch == num_pixels"

    enc = encoder_output.astype(jnp.float32)
    # Wrapper-side views (layout plumbing, zero in-kernel relayout cost):
    enc_ctx = enc.reshape(B, P * E)      # row j = flattened enc[j]   (context matmul)
    enc_rows = enc.reshape(B * P, E)     # row b*P+p = enc[b, p]      (projection matmul)

    vmem = pl.BlockSpec(memory_space=pltpu.MemorySpace.VMEM)
    smem = pl.BlockSpec(memory_space=pltpu.MemorySpace.SMEM)

    out_shape = (
        jax.ShapeDtypeStruct((B, P * E), jnp.float32),   # lane-dense context slab
        jax.ShapeDtypeStruct((B, P), jnp.float32),       # lane-dense attn slab
    )
    ctx_flat, attn_flat = pl.pallas_call(
        _bahdanau_kernel,
        out_shape=out_shape,
        in_specs=[vmem] * 8 + [smem],                    # scalar bias bf via SMEM
        out_specs=(vmem, vmem),
    )(
        enc_ctx, enc_rows,
        hidden_decoder.astype(jnp.float32),
        Wd.T, bd.reshape(1, A),
        We.T, be.reshape(1, A),
        Wf, bf.reshape(1, 1),
    )
    # Reshape to the module's output shapes outside the kernel (metadata only).
    return ctx_flat.reshape(B, P, E), attn_flat.reshape(B, P, 1)


def bahdanau_reference(encoder_output, hidden_decoder, params):
    """Pure-JAX transcription of the PyTorch forward (for verification)."""
    Wd, bd, We, be, Wf, bf = params
    dec_proj = hidden_decoder @ Wd.T + bd                             # (B, A)
    enc_proj = encoder_output @ We.T + be                             # (B, P, A)
    energy = jnp.tanh(dec_proj[:, None, :] + enc_proj) @ Wf.T + bf    # (B, P, 1)
    attn = jax.nn.softmax(energy, axis=-1)                            # (B, P, 1)
    # torch: encoder_output * attn.unsqueeze(2)  -> (B, B, P, E) when B == P
    prod = encoder_output[None, :, :, :] * attn[:, :, None, :]
    ctx = prod.sum(axis=1)                                            # (B, P, E)
    return ctx, attn


if __name__ == "__main__":
    key = jax.random.PRNGKey(0)
    (k_feat, k_enc, k_hid, k1, k2, k3, k4, k5, k6) = jax.random.split(key, 9)

    # ---------------- Encoder tail: (B, C, H, W) -> (B, H*W, C) --------------
    Bf, C, FH, FW = 2, 256, 8, 16
    features = jax.random.normal(k_feat, (Bf, C, FH, FW), dtype=jnp.float32)
    enc_feats = jax.block_until_ready(encoder_forward(features))
    ref_feats = jnp.transpose(features, (0, 2, 3, 1)).reshape(Bf, FH * FW, C)
    assert enc_feats.shape == (Bf, FH * FW, C)
    assert jnp.allclose(enc_feats, ref_feats)

    # ---------------- BahdanauAttention --------------------------------------
    B = 8          # batch_size (must equal num_pixels for the reference broadcast)
    P = 8          # num_pixels
    E = 32         # encoder_dim
    D = 16         # decoder_dim
    A = 32         # attention_dim

    encoder_output = jax.random.normal(k_enc, (B, P, E), dtype=jnp.float32)
    hidden_decoder = jax.random.normal(k_hid, (B, D), dtype=jnp.float32)

    # Deterministic parameter init (same shapes as the nn.Linear layers).
    Wd = 0.1 * jax.random.normal(k1, (A, D), dtype=jnp.float32)   # decoder_attention.weight
    bd = 0.1 * jax.random.normal(k2, (A,), dtype=jnp.float32)     # decoder_attention.bias
    We = 0.1 * jax.random.normal(k3, (A, E), dtype=jnp.float32)   # encoder_attention.weight
    be = 0.1 * jax.random.normal(k4, (A,), dtype=jnp.float32)     # encoder_attention.bias
    Wf = 0.1 * jax.random.normal(k5, (1, A), dtype=jnp.float32)   # full_attention.weight
    bf = 0.1 * jax.random.normal(k6, (1,), dtype=jnp.float32)     # full_attention.bias
    params = (Wd, bd, We, be, Wf, bf)

    ctx, attn = jax.block_until_ready(
        bahdanau_attention(encoder_output, hidden_decoder, params))

    ctx_ref, attn_ref = bahdanau_reference(encoder_output, hidden_decoder, params)

    assert ctx.shape == (B, P, E) and attn.shape == (B, P, 1)
    assert jnp.allclose(attn, attn_ref, atol=1e-5, rtol=1e-5)
    assert jnp.allclose(ctx, ctx_ref, atol=1e-4, rtol=1e-4)

    print("KERNEL_OK")
</pallas_src>

<mosaic_0001>
module attributes {stable_mosaic.version = 11 : i64} {
  func.func @_encoder_flatten_kernel(%arg0: i32, %arg1: memref<1x256x128xf32, #tpu.memory_space<vmem>>, %arg2: memref<1x128x256xf32, #tpu.memory_space<vmem>>) attributes {dimension_semantics = [#tpu.dimension_semantics<arbitrary>], iteration_bounds = array<i64: 2>, scalar_prefetch = 0 : i64, scratch_operands = 0 : i64, tpu.core_type = #tpu.core_type<tc>, window_params = [{transform_indices = @transform_0, window_bounds = array<i64: 1, 256, 128>}, {transform_indices = @transform_1, window_bounds = array<i64: 1, 128, 256>}]} {
    %c0 = arith.constant 0 : index
    %c0_0 = arith.constant 0 : index
    %c0_1 = arith.constant 0 : index
    %0 = vector.load %arg1[%c0, %c0_0, %c0_1] : memref<1x256x128xf32, #tpu.memory_space<vmem>>, vector<1x256x128xf32>
    %1 = vector.shape_cast %0 : vector<1x256x128xf32> to vector<256x128xf32>
    %2 = tpu.transpose %1, [1, 0] : vector<256x128xf32> -> vector<128x256xf32>
    %c0_2 = arith.constant 0 : index
    %c0_3 = arith.constant 0 : index
    %c0_4 = arith.constant 0 : index
    %3 = vector.load %arg2[%c0_2, %c0_3, %c0_4] : memref<1x128x256xf32, #tpu.memory_space<vmem>>, vector<1x128x256xf32>
    %4 = vector.shape_cast %3 : vector<1x128x256xf32> to vector<128x256xf32>
    %5 = vector.shape_cast %2 : vector<128x256xf32> to vector<1x128x256xf32>
    tpu.vector_store %arg2[%c0_2, %c0_3, %c0_4], %5 {strides = array<i32>} : memref<1x128x256xf32, #tpu.memory_space<vmem>>, vector<1x128x256xf32>,
    return
  }
  func.func @transform_0(%arg0: i32) -> (i32, i32, i32) {
    %c0_i32 = arith.constant 0 : i32
    %c0_i32_0 = arith.constant 0 : i32
    %c0_i32_1 = arith.constant 0 : i32
    return %arg0, %c0_i32, %c0_i32_0 : i32, i32, i32
  }
  func.func @transform_1(%arg0: i32) -> (i32, i32, i32) {
    %c0_i32 = arith.constant 0 : i32
    %c0_i32_0 = arith.constant 0 : i32
    %c0_i32_1 = arith.constant 0 : i32
    return %arg0, %c0_i32, %c0_i32_0 : i32, i32, i32
  }
}

</mosaic_0001>

<llo_original>
// kernel: tpu_custom_call.1
$region0: #{tpu_custom_call.1}
  #allocation0 [shape = 'u32[]', space=smem, size = 0x4, offset = 0x4, fixed_abs, tag = 'smem constant byte address 0x4 - core index']
  #allocation1 [shape = 'u32[144,128]{1,0:T(1,128)}', space=vmem, size = 0x12000, scoped, tag = 'internal scratch']
  %s0 = inlined_call_operand.hbm [shape: f32[2,256,128], index: 0, kind: input, shape index: {}]
  %s1 = inlined_call_operand.hbm [shape: f32[2,128,256], index: 1, kind: output, shape index: {}]
  %s2 = sld [smem:[#allocation0]]
  $region41: #{tpu_custom_call.1} parent=0
    _
  %s4 = ssub.s32 1, %s2
  %s5 = scalar_select 0, %s4, %s2
  $region1: #{tpu_custom_call.1} parent=0
    #allocation2 [shape = 'u8[262144]{0}', space=vmem, size = 0x40000, scoped, tag = 'input window, operand 0']
    #allocation3 [shape = 's32[2]{0}', space=sflag, size = 0x8, scoped, tag = 'scoped memory for tpu_custom_call.1']
    #allocation4 [shape = 's32[2]{0}', space=sflag, size = 0x8, scoped, tag = 'scoped memory for tpu_custom_call.1']
    #allocation5 [shape = 'u8[262144]{0}', space=vmem, size = 0x40000, scoped, tag = 'output window, operand 0']
    %6 = vsyncpa [#allocation3], 0
    %s7 = scalar_lea.sflag [#allocation3], 1
    %8 = vsyncpa %s7, 0
    %9 = vsyncpa [#allocation4], 0
    %s10 = scalar_lea.sflag [#allocation4], 1
    %11 = vsyncpa %s10, 0
    loop: start=0, step=1, limit=4
    $region2: #{tpu_custom_call.1} parent=1 // loop_pre_header
      _
    $region3: #{tpu_custom_call.1} parent=1 // loop_header
      %s13 = sphi 0, %s17
      %p14 = scmp.ge.s32.totalorder %s13, 4
      %s23 = sphi 0, %s25
      %s26 = sphi 0, %s23
      %s27 = sphi 0, %s26
      %s43 = sphi 0, %s27
      %s49 = sphi 0, %s51
      %s52 = sphi 0, %s49
      %s53 = sphi 0, %s52
      %s69 = sphi 0, %s53
    $region4: #{tpu_custom_call.1} parent=1 // loop_header_branch
      %16 = sbr.rel (%p14) target = $region8
    $region5: #{tpu_custom_call.1} parent=1 // loop_body
      %s18 = ssub.s32 %s13, 1
      %s19 = ssub.s32 %s13, 2
      %s20 = sadd.s32 %s13, 1
      %s21 = ssub.s32 %s13, %s20
      %p22 = scmp.eq.s32.totalorder %s21, 0
      %s24 = sadd.s32 %s23, 1
      %s25 = scalar_select %p22, %s23, %s24
      %p28 = pneg %p22
      %p29 = scmp.eq.s32.totalorder %s13, 1
      %p30 = por %p28, %p29
      %p31 = scmp.ne.s32.totalorder %s23, %s26
      %p32 = scmp.eq.s32.totalorder %s13, 0
      %p33 = por %p31, %p32
      %p34 = scmp.ne.s32.totalorder %s23, %s26
      %p35 = scmp.eq.s32.totalorder %s18, 1
      %p36 = por %p34, %p35
      %p37 = scmp.ne.s32.totalorder %s26, %s27
      %p38 = scmp.eq.s32.totalorder %s18, 0
      %p39 = por %p37, %p38
      %p40 = scmp.ne.s32.totalorder %s26, %s27
      %p41 = scmp.eq.s32.totalorder %s19, 1
      %p42 = por %p40, %p41
      %p44 = scmp.ne.s32.totalorder %s27, %s43
      %p45 = scmp.eq.s32.totalorder %s19, 0
      %p46 = por %p44, %p45
      %s47 = ssub.s32 %s13, %s20
      %p48 = scmp.eq.s32.totalorder %s47, 0
      %s50 = sadd.s32 %s49, 1
      %s51 = scalar_select %p48, %s49, %s50
      %p54 = pneg %p48
      %p55 = scmp.eq.s32.totalorder %s13, 1
      %p56 = por %p54, %p55
      %p57 = scmp.ne.s32.totalorder %s49, %s52
      %p58 = scmp.eq.s32.totalorder %s13, 0
      %p59 = por %p57, %p58
      %p60 = scmp.ne.s32.totalorder %s49, %s52
      %p61 = scmp.eq.s32.totalorder %s18, 1
      %p62 = por %p60, %p61
      %p63 = scmp.ne.s32.totalorder %s52, %s53
      %p64 = scmp.eq.s32.totalorder %s18, 0
      %p65 = por %p63, %p64
      %p66 = scmp.ne.s32.totalorder %s52, %s53
      %p67 = scmp.eq.s32.totalorder %s19, 1
      %p68 = por %p66, %p67
      %p70 = scmp.ne.s32.totalorder %s53, %s69
      %p71 = scmp.eq.s32.totalorder %s19, 0
      %p72 = por %p70, %p71
      %p73 = scmp.le.s32.totalorder 1, %s13
      %p74 = scmp.lt.s32.totalorder %s13, 3
      %p75 = pnand %p73, %p74
      %p76 = pneg %p75
      // Predicated region
      $region9: #{tpu_custom_call.1} parent=5 // pred_check
        _
      $region10: #{tpu_custom_call.1} parent=5 // pred_check_branch
        %78 = sbr.rel (%p75) target = $region12
      $region11: #{tpu_custom_call.1} parent=5 // pred_region
        %s79 = ssub.s32 %s13, 1
      $region12: #{tpu_custom_call.1} parent=5 // pred_fallthru
        _
      %p80 = scmp.lt.s32.totalorder %s13, 2
      // Predicated region
      $region13: #{tpu_custom_call.1} parent=5 // pred_check
        %p81 = pneg %p80
      $region14: #{tpu_custom_call.1} parent=5 // pred_check_branch
        %83 = sbr.rel (%p81) target = $region16
      $region15: #{tpu_custom_call.1} parent=5 // pred_region
        // Predicated region
        $region17: #{tpu_custom_call.1} parent=15 // pred_check
          %p84 = pneg %p33
        $region18: #{tpu_custom_call.1} parent=15 // pred_check_branch
          %86 = sbr.rel (%p84) target = $region20
        $region19: #{tpu_custom_call.1} parent=15 // pred_region
          %s87 = sand.u32 %s23, 1
          %s88 = scalar_lea.sflag [#allocation3], %s87
          %s89 = sand.u32 %s23, 1
          %s90 = smul.addr %s89, 256
          %s91 = scalar_lea.vmem [#allocation2], %s90
          %s93 = ssub.s32 4096, 4096
          %94 = vsyncadd %s88, %s93
          %s95 = smul.addr %s13, 32
          %s96 = smul.addr %s95, 128
          %s97 = scalar_lea.hbm %s0, %s96
          %s98 = sshll.u32 %s91, 4
          %s99 = int_to_ptr.vmem [resolvable:$true] %s98
          %104 = dma.hbm_to_vmem [thread:$0]  %s97, 4096, %s99, %s88, 128, 128, 8
        $region20: #{tpu_custom_call.1} parent=15 // pred_fallthru
          _
      $region16: #{tpu_custom_call.1} parent=5 // pred_fallthru
        _
      %p105 = scmp.le.s32.totalorder 1, %s13
      %p106 = scmp.lt.s32.totalorder %s13, 3
      %p107 = pnand %p105, %p106
      %p108 = pneg %p107
      // Predicated region
      $region21: #{tpu_custom_call.1} parent=5 // pred_check
        _
      $region22: #{tpu_custom_call.1} parent=5 // pred_check_branch
        %110 = sbr.rel (%p107) target = $region24
      $region23: #{tpu_custom_call.1} parent=5 // pred_region
        %s111 = ssub.s32 %s13, 1
        %s112 = sand.u32 %s26, 1
        %s113 = scalar_lea.sflag [#allocation3], %s112
        %s114 = sand.u32 %s26, 1
        %s115 = smul.addr %s114, 256
        %s116 = scalar_lea.vmem [#allocation2], %s115
        // Predicated region
        $region25: #{tpu_custom_call.1} parent=23 // pred_check
          %p117 = pneg %p39
        $region26: #{tpu_custom_call.1} parent=23 // pred_check_branch
          %119 = sbr.rel (%p117) target = $region28
        $region27: #{tpu_custom_call.1} parent=23 // pred_region
          %120 = dma.done %s113, 4096
        $region28: #{tpu_custom_call.1} parent=23 // pred_fallthru
          _
        %s121 = sand.u32 %s26, 1
        %s122 = scalar_lea.sflag [#allocation3], %s121
        %s123 = sand.u32 %s26, 1
        %s124 = smul.addr %s123, 256
        %s125 = scalar_lea.vmem [#allocation2], %s124
        %p126 = pneg %p39
        %p127 = pneg %p36
        %p128 = pneg %p65
        %p129 = pneg %p62
        %s130 = sand.u32 %s52, 1
        %s131 = scalar_lea.sflag [#allocation4], %s130
        %s132 = sand.u32 %s52, 1
        %s133 = smul.addr %s132, 256
        %s134 = scalar_lea.vmem [#allocation5], %s133
        %v135 = vld [vmem:[%s116] sm:$0xff]
        %v136 = vld [vmem:[%s116 + $0x8] sm:$0xff]
        %v137 = vld [vmem:[%s116 + $0x10] sm:$0xff]
        %v138 = vld [vmem:[%s116 + $0x18] sm:$0xff]
        %v139 = vld [vmem:[%s116 + $0x20] sm:$0xff]
        %v140 = vld [vmem:[%s116 + $0x28] sm:$0xff]
        %v141 = vld [vmem:[%s116 + $0x30] sm:$0xff]
        %v142 = vld [vmem:[%s116 + $0x38] sm:$0xff]
        %v143 = vld [vmem:[%s116 + $0x40] sm:$0xff]
        %v144 = vld [vmem:[%s116 + $0x48] sm:$0xff]
        %v145 = vld [vmem:[%s116 + $0x50] sm:$0xff]
        %v146 = vld [vmem:[%s116 + $0x58] sm:$0xff]
        %v147 = vld [vmem:[%s116 + $0x60] sm:$0xff]
        %v148 = vld [vmem:[%s116 + $0x68] sm:$0xff]
        %v149 = vld [vmem:[%s116 + $0x70] sm:$0xff]
        %v150 = vld [vmem:[%s116 + $0x78] sm:$0xff]
        %v151 = vld [vmem:[%s116 + $0x80] sm:$0xff]
        %v152 = vld [vmem:[%s116 + $0x88] sm:$0xff]
        %v153 = vld [vmem:[%s116 + $0x90] sm:$0xff]
        %v154 = vld [vmem:[%s116 + $0x98] sm:$0xff]
        %v155 = vld [vmem:[%s116 + $0xa0] sm:$0xff]
        %v156 = vld [vmem:[%s116 + $0xa8] sm:$0xff]
        %v157 = vld [vmem:[%s116 + $0xb0] sm:$0xff]
        %v158 = vld [vmem:[%s116 + $0xb8] sm:$0xff]
        %v159 = vld [vmem:[%s116 + $0xc0] sm:$0xff]
        %v160 = vld [vmem:[%s116 + $0xc8] sm:$0xff]
        %v161 = vld [vmem:[%s116 + $0xd0] sm:$0xff]
        %v162 = vld [vmem:[%s116 + $0xd8] sm:$0xff]
        %v163 = vld [vmem:[%s116 + $0xe0] sm:$0xff]
        %v164 = vld [vmem:[%s116 + $0xe8] sm:$0xff]
        %v165 = vld [vmem:[%s116 + $0xf0] sm:$0xff]
        %v166 = vld [vmem:[%s116 + $0xf8] sm:$0xff]
        %167 = vxpose.xlu0.b32.start [1/16] %v135, 128
        %168 = vxpose.xlu0.b32.cont [2/16] %v136, 128
        %169 = vxpose.xlu0.b32.cont [3/16] %v137, 128
        %170 = vxpose.xlu0.b32.cont [4/16] %v138, 128
        %171 = vxpose.xlu0.b32.cont [5/16] %v139, 128
        %172 = vxpose.xlu0.b32.cont [6/16] %v140, 128
        %173 = vxpose.xlu0.b32.cont [7/16] %v141, 128
        %174 = vxpose.xlu0.b32.cont [8/16] %v142, 128
        %175 = vxpose.xlu0.b32.cont [9/16] %v143, 128
        %176 = vxpose.xlu0.b32.cont [10/16] %v144, 128
        %177 = vxpose.xlu0.b32.cont [11/16] %v145, 128
        %178 = vxpose.xlu0.b32.cont [12/16] %v146, 128
        %179 = vxpose.xlu0.b32.cont [13/16] %v147, 128
        %180 = vxpose.xlu0.b32.cont [14/16] %v148, 128
        %181 = vxpose.xlu0.b32.cont [15/16] %v149, 128
        %182 = vxpose.xlu0.b32.end [16/16] %v150, 128
        %v183 = vpop.trf.xlu0
        %v184 = vpop.trf.xlu0
        %v185 = vpop.trf.xlu0
        %v186 = vpop.trf.xlu0
        %v187 = vpop.trf.xlu0
        %v188 = vpop.trf.xlu0
        %v189 = vpop.trf.xlu0
        %v190 = vpop.trf.xlu0
        %v191 = vpop.trf.xlu0
        %v192 = vpop.trf.xlu0
        %v193 = vpop.trf.xlu0
        %v194 = vpop.trf.xlu0
        %v195 = vpop.trf.xlu0
        %v196 = vpop.trf.xlu0
        %v197 = vpop.trf.xlu0
        %v198 = vpop.trf.xlu0
        %199 = vxpose.xlu0.b32.start [1/16] %v151, 128
        %200 = vxpose.xlu0.b32.cont [2/16] %v152, 128
        %201 = vxpose.xlu0.b32.cont [3/16] %v153, 128
        %202 = vxpose.xlu0.b32.cont [4/16] %v154, 128
        %203 = vxpose.xlu0.b32.cont [5/16] %v155, 128
        %204 = vxpose.xlu0.b32.cont [6/16] %v156, 128
        %205 = vxpose.xlu0.b32.cont [7/16] %v157, 128
        %206 = vxpose.xlu0.b32.cont [8/16] %v158, 128
        %207 = vxpose.xlu0.b32.cont [9/16] %v159, 128
        %208 = vxpose.xlu0.b32.cont [10/16] %v160, 128
        %209 = vxpose.xlu0.b32.cont [11/16] %v161, 128
        %210 = vxpose.xlu0.b32.cont [12/16] %v162, 128
        %211 = vxpose.xlu0.b32.cont [13/16] %v163, 128
        %212 = vxpose.xlu0.b32.cont [14/16] %v164, 128
        %213 = vxpose.xlu0.b32.cont [15/16] %v165, 128
        %214 = vxpose.xlu0.b32.end [16/16] %v166, 128
        %v215 = vpop.trf.xlu0
        %v216 = vpop.trf.xlu0
        %v217 = vpop.trf.xlu0
        %v218 = vpop.trf.xlu0
        %v219 = vpop.trf.xlu0
        %v220 = vpop.trf.xlu0
        %v221 = vpop.trf.xlu0
        %v222 = vpop.trf.xlu0
        %v223 = vpop.trf.xlu0
        %v224 = vpop.trf.xlu0
        %v225 = vpop.trf.xlu0
        %v226 = vpop.trf.xlu0
        %v227 = vpop.trf.xlu0
        %v228 = vpop.trf.xlu0
        %v229 = vpop.trf.xlu0
        %v230 = vpop.trf.xlu0
        %231 = vst [vmem:[%s134] sm:$0xff] %v183
        %232 = vst [vmem:[%s134 + $0x8] sm:$0xff] %v215
        %233 = vst [vmem:[%s134 + $0x10] sm:$0xff] %v184
        %234 = vst [vmem:[%s134 + $0x18] sm:$0xff] %v216
        %235 = vst [vmem:[%s134 + $0x20] sm:$0xff] %v185
        %236 = vst [vmem:[%s134 + $0x28] sm:$0xff] %v217
        %237 = vst [vmem:[%s134 + $0x30] sm:$0xff] %v186
        %238 = vst [vmem:[%s134 + $0x38] sm:$0xff] %v218
        %239 = vst [vmem:[%s134 + $0x40] sm:$0xff] %v187
        %240 = vst [vmem:[%s134 + $0x48] sm:$0xff] %v219
        %241 = vst [vmem:[%s134 + $0x50] sm:$0xff] %v188
        %242 = vst [vmem:[%s134 + $0x58] sm:$0xff] %v220
        %243 = vst [vmem:[%s134 + $0x60] sm:$0xff] %v189
        %244 = vst [vmem:[%s134 + $0x68] sm:$0xff] %v221
        %245 = vst [vmem:[%s134 + $0x70] sm:$0xff] %v190
        %246 = vst [vmem:[%s134 + $0x78] sm:$0xff] %v222
        %247 = vst [vmem:[%s134 + $0x80] sm:$0xff] %v191
        %248 = vst [vmem:[%s134 + $0x88] sm:$0xff] %v223
        %249 = vst [vmem:[%s134 + $0x90] sm:$0xff] %v192
        %250 = vst [vmem:[%s134 + $0x98] sm:$0xff] %v224
        %251 = vst [vmem:[%s134 + $0xa0] sm:$0xff] %v193
        %252 = vst [vmem:[%s134 + $0xa8] sm:$0xff] %v225
        %253 = vst [vmem:[%s134 + $0xb0] sm:$0xff] %v194
        %254 = vst [vmem:[%s134 + $0xb8] sm:$0xff] %v226
        %255 = vst [vmem:[%s134 + $0xc0] sm:$0xff] %v195
        %256 = vst [vmem:[%s134 + $0xc8] sm:$0xff] %v227
        %257 = vst [vmem:[%s134 + $0xd0] sm:$0xff] %v196
        %258 = vst [vmem:[%s134 + $0xd8] sm:$0xff] %v228
        %259 = vst [vmem:[%s134 + $0xe0] sm:$0xff] %v197
        %260 = vst [vmem:[%s134 + $0xe8] sm:$0xff] %v229
        %261 = vst [vmem:[%s134 + $0xf0] sm:$0xff] %v198
        %262 = vst [vmem:[%s134 + $0xf8] sm:$0xff] %v230
        %s263 = sand.u32 %s52, 1
        %s264 = scalar_lea.sflag [#allocation4], %s263
        %s265 = sand.u32 %s52, 1
        %s266 = smul.addr %s265, 256
        %s267 = scalar_lea.vmem [#allocation5], %s266
        // Predicated region
        $region29: #{tpu_custom_call.1} parent=23 // pred_check
          %p268 = pneg %p62
        $region30: #{tpu_custom_call.1} parent=23 // pred_check_branch
          %270 = sbr.rel (%p268) target = $region32
        $region31: #{tpu_custom_call.1} parent=23 // pred_region
          %s272 = ssub.s32 4096, 4096
          %273 = vsyncadd %s264, %s272
          %s274 = smul.addr %s18, 32
          %s275 = smul.addr %s274, 128
          %s276 = scalar_lea.hbm %s1, %s275
          %s277 = sshll.u32 %s267, 4
          %s278 = int_to_ptr.vmem [resolvable:$true] %s277
          %283 = dma.vmem_to_hbm [thread:$0]  %s278, 4096, %s276, %s264, 256, 256, 16
        $region32: #{tpu_custom_call.1} parent=23 // pred_fallthru
          _
      $region24: #{tpu_custom_call.1} parent=5 // pred_fallthru
        _
      %p284 = scmp.le.s32.totalorder 2, %s13
      // Predicated region
      $region33: #{tpu_custom_call.1} parent=5 // pred_check
        %p285 = pneg %p284
      $region34: #{tpu_custom_call.1} parent=5 // pred_check_branch
        %287 = sbr.rel (%p285) target = $region36
      $region35: #{tpu_custom_call.1} parent=5 // pred_region
        %s288 = ssub.s32 %s13, 2
        // Predicated region
        $region37: #{tpu_custom_call.1} parent=35 // pred_check
          %p289 = pneg %p68
        $region38: #{tpu_custom_call.1} parent=35 // pred_check_branch
          %291 = sbr.rel (%p289) target = $region40
        $region39: #{tpu_custom_call.1} parent=35 // pred_region
          %s292 = sand.u32 %s53, 1
          %s293 = scalar_lea.sflag [#allocation4], %s292
          %s294 = sand.u32 %s53, 1
          %s295 = smul.addr %s294, 256
          %s296 = scalar_lea.vmem [#allocation5], %s295
          %297 = dma.done %s293, 4096
        $region40: #{tpu_custom_call.1} parent=35 // pred_fallthru
          _
      $region36: #{tpu_custom_call.1} parent=5 // pred_fallthru
        _
    $region6: #{tpu_custom_call.1} parent=1 // loop_footer
      %s17 = sadd.s32 1, %s13
    $region7: #{tpu_custom_call.1} parent=1 // loop_footer_branch
      %12 = sbr.rel target = $region3
    $region8: #{tpu_custom_call.1} parent=1 // loop_exit
      _
    %298 = vsyncpa [#allocation3], 1
    %s299 = scalar_lea.sflag [#allocation3], 1
    %300 = vsyncpa %s299, 1
    %301 = vsyncpa [#allocation4], 1
    %s302 = scalar_lea.sflag [#allocation4], 1
    %303 = vsyncpa %s302, 1

</llo_original>
